<compile_context>
chip_gen: v5e
topology: v5e:2x2
jax: 0.10.0
libtpu: 0.0.40
codegen_flags: <defaults>
</compile_context>

<pallas_src>
import jax
import jax.numpy as jnp
from jax import lax
from jax.experimental import pallas as pl
from jax.experimental.pallas import tpu as pltpu

GAMMA = 10.0

# Per-buffer budget for one (B, C_tile, D) f32 input block (pipeline double-buffers it).
_BLOCK_BYTES_TARGET = 4 * 1024 * 1024


def _choose_c_tile(B, C, D):
    """Largest multiple-of-8 divisor of C whose (B, C_tile, D) f32 block fits the
    budget; falls back to the full C (single block, always layout-legal since
    C_tile == full dim) when C has no multiple-of-8 divisor."""
    bytes_per_channel = B * D * 4
    candidates = [t for t in range(8, C + 1, 8) if C % t == 0]
    if not candidates:
        return C
    fitting = [t for t in candidates if t * bytes_per_channel <= _BLOCK_BYTES_TARGET]
    return max(fitting) if fitting else min(candidates)


def _make_branch_div_kernel(B, C_total, pairs):
    inv_c = 1.0 / float(C_total)

    def kernel(x_ref, snm_ref, acc_ref):
        # x_ref: (B, C_tile, D) VMEM; snm_ref / acc_ref: (B, B) f32
        step = pl.program_id(0)

        @pl.when(step == 0)
        def _init():
            acc_ref[...] = jnp.zeros_like(acc_ref)

        # Load each branch tile once; (C_tile, D): C on sublanes, D dense on lanes.
        xs = [x_ref[i] for i in range(B)]

        ii = lax.broadcasted_iota(jnp.int32, (B, B), 0)
        jj = lax.broadcasted_iota(jnp.int32, (B, B), 1)

        # Upper triangle only (i < j); mirror into (i, j) and (j, i).
        # TODO(synk): for large B (>= ~64) switch the pairwise distances to the
        # Gram/MXU trick (||xi||^2 + ||xj||^2 - 2*xi@xj^T); the VPU path below
        # is the right choice for tiny B where the MXU tile would be ~empty.
        upd = jnp.zeros((B, B), jnp.float32)
        for (i, j) in pairs:
            d = xs[i] - xs[j]                                   # (C_tile, D)  VPU
            sq = jnp.sum(d * d, axis=-1, keepdims=True)         # (C_tile, 1)  lane reduce
            part = jnp.sum(jnp.exp(-GAMMA * sq),                # EUP exp
                           axis=0, keepdims=True)               # (1, 1) partial over C_tile
            sel = ((ii == i) & (jj == j)) | ((ii == j) & (jj == i))
            upd = jnp.where(sel, part, upd)
        acc_ref[...] += upd

        @pl.when(step == pl.num_programs(0) - 1)
        def _finalize():
            # Mean over all channels; diagonal was never written -> stays 0.
            snm_ref[...] = acc_ref[...] * inv_c

    return kernel


def _pairwise_similarity_matrix(xk, c_tile=None):
    """xk: (B, C, D) float32 -> snm: (B, B) float32 via Pallas."""
    B, C, D = xk.shape
    if c_tile is None:
        c_tile = _choose_c_tile(B, C, D)
    assert C % c_tile == 0, "C_tile must evenly divide C"
    n_steps = C // c_tile
    pairs = [(i, j) for i in range(B) for j in range(i + 1, B)]
    kernel = _make_branch_div_kernel(B, C, pairs)
    return pl.pallas_call(
        kernel,
        out_shape=jax.ShapeDtypeStruct((B, B), jnp.float32),
        grid_spec=pltpu.PrefetchScalarGridSpec(
            num_scalar_prefetch=0,
            grid=(n_steps,),
            in_specs=[pl.BlockSpec((B, c_tile, D), lambda c: (0, c, 0))],
            out_specs=pl.BlockSpec((B, B), lambda c: (0, 0)),
            scratch_shapes=[pltpu.VMEM((B, B), jnp.float32)],
        ),
        compiler_params=pltpu.CompilerParams(
            dimension_semantics=("arbitrary",),   # C is the reduction axis
            vmem_limit_bytes=32 * 1024 * 1024,
        ),
    )(xk)


def branch_diversity(x, type="spatial", c_tile=None):
    """JAX/Pallas equivalent of BranchDiversity.forward.

    Returns a dict with 'snm', 'direct_div', 'det_div', 'logdet_div'
    (the PyTorch module stores these on `self` and returns `self`).
    """
    x = x.astype(jnp.float32)
    if type == "spatial":
        assert x.ndim == 4, "spatial expects (num_branches, C, H, W)"
        B, C = x.shape[0], x.shape[1]
        xk = x.reshape(B, C, -1)
    elif type == "channel":
        assert x.ndim == 3, "channel expects (num_branches, C, L)"
        B, C = x.shape[0], x.shape[1]
        xk = x
    else:
        raise ValueError(f"unknown type {type}")

    snm = _pairwise_similarity_matrix(xk, c_tile=c_tile)   # (B, B)

    direct_div = jnp.sum(snm)
    # TODO(synk): det / logdet of the tiny (B,B) matrix uses LU in plain JAX;
    # there is no clean Pallas TPU equivalent for a general determinant.
    det = jnp.linalg.det(snm)
    det_div = -det
    sign, logabs = jnp.linalg.slogdet(snm)
    # match torch.logdet: +det -> log(det); det==0 -> -inf; det<0 -> nan
    logdet = jnp.where(sign > 0, logabs,
                       jnp.where(sign == 0, -jnp.inf, jnp.nan))
    logdet_div = -logdet
    return {
        "snm": snm,
        "direct_div": direct_div,
        "det_div": det_div,
        "logdet_div": logdet_div,
    }


def _reference_snm(xk_bcd):
    """Pure-jnp reference; xk_bcd: (B, C, D)."""
    B = xk_bcd.shape[0]
    diff = xk_bcd[:, None] - xk_bcd[None, :]        # (B, B, C, D)
    sq = jnp.sum(diff * diff, axis=-1)              # (B, B, C)
    snm = jnp.mean(jnp.exp(-GAMMA * sq), axis=-1)   # (B, B)
    return snm * (1.0 - jnp.eye(B, dtype=snm.dtype))


if __name__ == "__main__":
    key = jax.random.PRNGKey(0)
    B, C, H, W = 4, 4, 16, 16
    # small magnitude so exp(-10 * ||.||^2) is not uniformly ~0
    x = 0.05 * jax.random.normal(key, (B, C, H, W), dtype=jnp.float32)

    # spatial branch
    out_sp = branch_diversity(x, type="spatial")
    jax.block_until_ready(out_sp["snm"])
    jax.block_until_ready(out_sp["direct_div"])
    jax.block_until_ready(out_sp["det_div"])
    jax.block_until_ready(out_sp["logdet_div"])
    ref_sp = _reference_snm(x.reshape(B, C, -1))
    assert jnp.allclose(out_sp["snm"], ref_sp, atol=1e-5), (out_sp["snm"], ref_sp)
    assert jnp.allclose(out_sp["direct_div"], jnp.sum(ref_sp), atol=1e-5)

    # channel branch (3-D input)
    x3 = x.reshape(B, C, H * W)
    out_ch = branch_diversity(x3, type="channel")
    jax.block_until_ready(out_ch["snm"])
    ref_ch = _reference_snm(x3)
    assert jnp.allclose(out_ch["snm"], ref_ch, atol=1e-5), (out_ch["snm"], ref_ch)

    # explicitly exercise the multi-step tiled-C accumulation path (grid = (2,))
    xt = 0.05 * jax.random.normal(jax.random.PRNGKey(0), (4, 16, 16, 16),
                                  dtype=jnp.float32)
    out_t = branch_diversity(xt, type="spatial", c_tile=8)
    jax.block_until_ready(out_t["snm"])
    ref_t = _reference_snm(xt.reshape(4, 16, -1))
    assert jnp.allclose(out_t["snm"], ref_t, atol=1e-5), (out_t["snm"], ref_t)

    print("KERNEL_OK")
</pallas_src>

<mosaic_0001>
module attributes {stable_mosaic.version = 11 : i64} {
  func.func @kernel(%arg0: i32, %arg1: memref<4x4x256xf32, #tpu.memory_space<vmem>>, %arg2: memref<4x4xf32, #tpu.memory_space<vmem>>, %arg3: memref<4x4xf32, #tpu.memory_space<vmem>>) attributes {dimension_semantics = [#tpu.dimension_semantics<arbitrary>], iteration_bounds = array<i64: 1>, scalar_prefetch = 0 : i64, scratch_operands = 1 : i64, tpu.core_type = #tpu.core_type<tc>, window_params = [{transform_indices = @transform_0, window_bounds = array<i64: 4, 4, 256>}, {pipeline_mode = #tpu.pipeline_mode<synchronous>, transform_indices = @transform_1, window_bounds = array<i64: 4, 4>}]} {
    %c0_i32 = arith.constant 0 : i32
    %0 = arith.cmpi eq, %arg0, %c0_i32 : i32
    %1 = arith.extui %0 : i1 to i32
    %c0_i32_0 = arith.constant 0 : i32
    %2 = arith.cmpi ne, %1, %c0_i32_0 : i32
    scf.if %2 {
      %cst_54 = arith.constant 0.000000e+00 : f32
      %158 = vector.broadcast %cst_54 : f32 to vector<4x4xf32>
      %c0_55 = arith.constant 0 : index
      %c0_56 = arith.constant 0 : index
      %159 = vector.load %arg3[%c0_55, %c0_56] : memref<4x4xf32, #tpu.memory_space<vmem>>, vector<4x4xf32>
      tpu.vector_store %arg3[%c0_55, %c0_56], %158 {strides = array<i32>} : memref<4x4xf32, #tpu.memory_space<vmem>>, vector<4x4xf32>,
    } else {
    }
    %c0 = arith.constant 0 : index
    %c0_1 = arith.constant 0 : index
    %c0_2 = arith.constant 0 : index
    %3 = vector.load %arg1[%c0, %c0_1, %c0_2] : memref<4x4x256xf32, #tpu.memory_space<vmem>>, vector<1x4x256xf32>
    %4 = vector.shape_cast %3 : vector<1x4x256xf32> to vector<4x256xf32>
    %c1 = arith.constant 1 : index
    %c0_3 = arith.constant 0 : index
    %c0_4 = arith.constant 0 : index
    %5 = vector.load %arg1[%c1, %c0_3, %c0_4] : memref<4x4x256xf32, #tpu.memory_space<vmem>>, vector<1x4x256xf32>
    %6 = vector.shape_cast %5 : vector<1x4x256xf32> to vector<4x256xf32>
    %c2 = arith.constant 2 : index
    %c0_5 = arith.constant 0 : index
    %c0_6 = arith.constant 0 : index
    %7 = vector.load %arg1[%c2, %c0_5, %c0_6] : memref<4x4x256xf32, #tpu.memory_space<vmem>>, vector<1x4x256xf32>
    %8 = vector.shape_cast %7 : vector<1x4x256xf32> to vector<4x256xf32>
    %c3 = arith.constant 3 : index
    %c0_7 = arith.constant 0 : index
    %c0_8 = arith.constant 0 : index
    %9 = vector.load %arg1[%c3, %c0_7, %c0_8] : memref<4x4x256xf32, #tpu.memory_space<vmem>>, vector<1x4x256xf32>
    %10 = vector.shape_cast %9 : vector<1x4x256xf32> to vector<4x256xf32>
    %11 = tpu.iota {dimensions = array<i32: 0>} : vector<4x4xi32>
    %12 = tpu.iota {dimensions = array<i32: 1>} : vector<4x4xi32>
    %cst = arith.constant 0.000000e+00 : f32
    %13 = vector.broadcast %cst : f32 to vector<4x4xf32>
    %14 = arith.subf %4, %6 : vector<4x256xf32>
    %15 = arith.mulf %14, %14 : vector<4x256xf32>
    %cst_9 = arith.constant dense<0.000000e+00> : vector<4xf32>
    %16 = vector.multi_reduction <add>, %15, %cst_9 [1] : vector<4x256xf32> to vector<4xf32>
    %17 = vector.shape_cast %16 : vector<4xf32> to vector<4x1xf32>
    %cst_10 = arith.constant -1.000000e+01 : f32
    %18 = vector.broadcast %cst_10 : f32 to vector<4x1xf32>
    %19 = arith.mulf %18, %17 : vector<4x1xf32>
    %20 = math.exp %19 : vector<4x1xf32>
    %cst_11 = arith.constant dense<0.000000e+00> : vector<1xf32>
    %21 = vector.multi_reduction <add>, %20, %cst_11 [0] : vector<4x1xf32> to vector<1xf32>
    %22 = vector.shape_cast %21 : vector<1xf32> to vector<1x1xf32>
    %c0_i32_12 = arith.constant 0 : i32
    %23 = vector.broadcast %c0_i32_12 : i32 to vector<4x4xi32>
    %24 = arith.cmpi eq, %11, %23 : vector<4x4xi32>
    %c1_i32 = arith.constant 1 : i32
    %25 = vector.broadcast %c1_i32 : i32 to vector<4x4xi32>
    %26 = arith.cmpi eq, %12, %25 : vector<4x4xi32>
    %27 = arith.andi %24, %26 : vector<4x4xi1>
    %c1_i32_13 = arith.constant 1 : i32
    %28 = vector.broadcast %c1_i32_13 : i32 to vector<4x4xi32>
    %29 = arith.cmpi eq, %11, %28 : vector<4x4xi32>
    %c0_i32_14 = arith.constant 0 : i32
    %30 = vector.broadcast %c0_i32_14 : i32 to vector<4x4xi32>
    %31 = arith.cmpi eq, %12, %30 : vector<4x4xi32>
    %32 = arith.andi %29, %31 : vector<4x4xi1>
    %33 = arith.ori %27, %32 : vector<4x4xi1>
    %34 = vector.shape_cast %22 : vector<1x1xf32> to vector<1x1xf32>
    %35 = vector.broadcast %34 : vector<1x1xf32> to vector<4x4xf32>
    %36 = arith.select %33, %35, %13 : vector<4x4xi1>, vector<4x4xf32>
    %37 = arith.subf %4, %8 : vector<4x256xf32>
    %38 = arith.mulf %37, %37 : vector<4x256xf32>
    %cst_15 = arith.constant dense<0.000000e+00> : vector<4xf32>
    %39 = vector.multi_reduction <add>, %38, %cst_15 [1] : vector<4x256xf32> to vector<4xf32>
    %40 = vector.shape_cast %39 : vector<4xf32> to vector<4x1xf32>
    %cst_16 = arith.constant -1.000000e+01 : f32
    %41 = vector.broadcast %cst_16 : f32 to vector<4x1xf32>
    %42 = arith.mulf %41, %40 : vector<4x1xf32>
    %43 = math.exp %42 : vector<4x1xf32>
    %cst_17 = arith.constant dense<0.000000e+00> : vector<1xf32>
    %44 = vector.multi_reduction <add>, %43, %cst_17 [0] : vector<4x1xf32> to vector<1xf32>
    %45 = vector.shape_cast %44 : vector<1xf32> to vector<1x1xf32>
    %c0_i32_18 = arith.constant 0 : i32
    %46 = vector.broadcast %c0_i32_18 : i32 to vector<4x4xi32>
    %47 = arith.cmpi eq, %11, %46 : vector<4x4xi32>
    %c2_i32 = arith.constant 2 : i32
    %48 = vector.broadcast %c2_i32 : i32 to vector<4x4xi32>
    %49 = arith.cmpi eq, %12, %48 : vector<4x4xi32>
    %50 = arith.andi %47, %49 : vector<4x4xi1>
    %c2_i32_19 = arith.constant 2 : i32
    %51 = vector.broadcast %c2_i32_19 : i32 to vector<4x4xi32>
    %52 = arith.cmpi eq, %11, %51 : vector<4x4xi32>
    %c0_i32_20 = arith.constant 0 : i32
    %53 = vector.broadcast %c0_i32_20 : i32 to vector<4x4xi32>
    %54 = arith.cmpi eq, %12, %53 : vector<4x4xi32>
    %55 = arith.andi %52, %54 : vector<4x4xi1>
    %56 = arith.ori %50, %55 : vector<4x4xi1>
    %57 = vector.shape_cast %45 : vector<1x1xf32> to vector<1x1xf32>
    %58 = vector.broadcast %57 : vector<1x1xf32> to vector<4x4xf32>
    %59 = arith.select %56, %58, %36 : vector<4x4xi1>, vector<4x4xf32>
    %60 = arith.subf %4, %10 : vector<4x256xf32>
    %61 = arith.mulf %60, %60 : vector<4x256xf32>
    %cst_21 = arith.constant dense<0.000000e+00> : vector<4xf32>
    %62 = vector.multi_reduction <add>, %61, %cst_21 [1] : vector<4x256xf32> to vector<4xf32>
    %63 = vector.shape_cast %62 : vector<4xf32> to vector<4x1xf32>
    %cst_22 = arith.constant -1.000000e+01 : f32
    %64 = vector.broadcast %cst_22 : f32 to vector<4x1xf32>
    %65 = arith.mulf %64, %63 : vector<4x1xf32>
    %66 = math.exp %65 : vector<4x1xf32>
    %cst_23 = arith.constant dense<0.000000e+00> : vector<1xf32>
    %67 = vector.multi_reduction <add>, %66, %cst_23 [0] : vector<4x1xf32> to vector<1xf32>
    %68 = vector.shape_cast %67 : vector<1xf32> to vector<1x1xf32>
    %c0_i32_24 = arith.constant 0 : i32
    %69 = vector.broadcast %c0_i32_24 : i32 to vector<4x4xi32>
    %70 = arith.cmpi eq, %11, %69 : vector<4x4xi32>
    %c3_i32 = arith.constant 3 : i32
    %71 = vector.broadcast %c3_i32 : i32 to vector<4x4xi32>
    %72 = arith.cmpi eq, %12, %71 : vector<4x4xi32>
    %73 = arith.andi %70, %72 : vector<4x4xi1>
    %c3_i32_25 = arith.constant 3 : i32
    %74 = vector.broadcast %c3_i32_25 : i32 to vector<4x4xi32>
    %75 = arith.cmpi eq, %11, %74 : vector<4x4xi32>
    %c0_i32_26 = arith.constant 0 : i32
    %76 = vector.broadcast %c0_i32_26 : i32 to vector<4x4xi32>
    %77 = arith.cmpi eq, %12, %76 : vector<4x4xi32>
    %78 = arith.andi %75, %77 : vector<4x4xi1>
    %79 = arith.ori %73, %78 : vector<4x4xi1>
    %80 = vector.shape_cast %68 : vector<1x1xf32> to vector<1x1xf32>
    %81 = vector.broadcast %80 : vector<1x1xf32> to vector<4x4xf32>
    %82 = arith.select %79, %81, %59 : vector<4x4xi1>, vector<4x4xf32>
    %83 = arith.subf %6, %8 : vector<4x256xf32>
    %84 = arith.mulf %83, %83 : vector<4x256xf32>
    %cst_27 = arith.constant dense<0.000000e+00> : vector<4xf32>
    %85 = vector.multi_reduction <add>, %84, %cst_27 [1] : vector<4x256xf32> to vector<4xf32>
    %86 = vector.shape_cast %85 : vector<4xf32> to vector<4x1xf32>
    %cst_28 = arith.constant -1.000000e+01 : f32
    %87 = vector.broadcast %cst_28 : f32 to vector<4x1xf32>
    %88 = arith.mulf %87, %86 : vector<4x1xf32>
    %89 = math.exp %88 : vector<4x1xf32>
    %cst_29 = arith.constant dense<0.000000e+00> : vector<1xf32>
    %90 = vector.multi_reduction <add>, %89, %cst_29 [0] : vector<4x1xf32> to vector<1xf32>
    %91 = vector.shape_cast %90 : vector<1xf32> to vector<1x1xf32>
    %c1_i32_30 = arith.constant 1 : i32
    %92 = vector.broadcast %c1_i32_30 : i32 to vector<4x4xi32>
    %93 = arith.cmpi eq, %11, %92 : vector<4x4xi32>
    %c2_i32_31 = arith.constant 2 : i32
    %94 = vector.broadcast %c2_i32_31 : i32 to vector<4x4xi32>
    %95 = arith.cmpi eq, %12, %94 : vector<4x4xi32>
    %96 = arith.andi %93, %95 : vector<4x4xi1>
    %c2_i32_32 = arith.constant 2 : i32
    %97 = vector.broadcast %c2_i32_32 : i32 to vector<4x4xi32>
    %98 = arith.cmpi eq, %11, %97 : vector<4x4xi32>
    %c1_i32_33 = arith.constant 1 : i32
    %99 = vector.broadcast %c1_i32_33 : i32 to vector<4x4xi32>
    %100 = arith.cmpi eq, %12, %99 : vector<4x4xi32>
    %101 = arith.andi %98, %100 : vector<4x4xi1>
    %102 = arith.ori %96, %101 : vector<4x4xi1>
    %103 = vector.shape_cast %91 : vector<1x1xf32> to vector<1x1xf32>
    %104 = vector.broadcast %103 : vector<1x1xf32> to vector<4x4xf32>
    %105 = arith.select %102, %104, %82 : vector<4x4xi1>, vector<4x4xf32>
    %106 = arith.subf %6, %10 : vector<4x256xf32>
    %107 = arith.mulf %106, %106 : vector<4x256xf32>
    %cst_34 = arith.constant dense<0.000000e+00> : vector<4xf32>
    %108 = vector.multi_reduction <add>, %107, %cst_34 [1] : vector<4x256xf32> to vector<4xf32>
    %109 = vector.shape_cast %108 : vector<4xf32> to vector<4x1xf32>
    %cst_35 = arith.constant -1.000000e+01 : f32
    %110 = vector.broadcast %cst_35 : f32 to vector<4x1xf32>
    %111 = arith.mulf %110, %109 : vector<4x1xf32>
    %112 = math.exp %111 : vector<4x1xf32>
    %cst_36 = arith.constant dense<0.000000e+00> : vector<1xf32>
    %113 = vector.multi_reduction <add>, %112, %cst_36 [0] : vector<4x1xf32> to vector<1xf32>
    %114 = vector.shape_cast %113 : vector<1xf32> to vector<1x1xf32>
    %c1_i32_37 = arith.constant 1 : i32
    %115 = vector.broadcast %c1_i32_37 : i32 to vector<4x4xi32>
    %116 = arith.cmpi eq, %11, %115 : vector<4x4xi32>
    %c3_i32_38 = arith.constant 3 : i32
    %117 = vector.broadcast %c3_i32_38 : i32 to vector<4x4xi32>
    %118 = arith.cmpi eq, %12, %117 : vector<4x4xi32>
    %119 = arith.andi %116, %118 : vector<4x4xi1>
    %c3_i32_39 = arith.constant 3 : i32
    %120 = vector.broadcast %c3_i32_39 : i32 to vector<4x4xi32>
    %121 = arith.cmpi eq, %11, %120 : vector<4x4xi32>
    %c1_i32_40 = arith.constant 1 : i32
    %122 = vector.broadcast %c1_i32_40 : i32 to vector<4x4xi32>
    %123 = arith.cmpi eq, %12, %122 : vector<4x4xi32>
    %124 = arith.andi %121, %123 : vector<4x4xi1>
    %125 = arith.ori %119, %124 : vector<4x4xi1>
    %126 = vector.shape_cast %114 : vector<1x1xf32> to vector<1x1xf32>
    %127 = vector.broadcast %126 : vector<1x1xf32> to vector<4x4xf32>
    %128 = arith.select %125, %127, %105 : vector<4x4xi1>, vector<4x4xf32>
    %129 = arith.subf %8, %10 : vector<4x256xf32>
    %130 = arith.mulf %129, %129 : vector<4x256xf32>
    %cst_41 = arith.constant dense<0.000000e+00> : vector<4xf32>
    %131 = vector.multi_reduction <add>, %130, %cst_41 [1] : vector<4x256xf32> to vector<4xf32>
    %132 = vector.shape_cast %131 : vector<4xf32> to vector<4x1xf32>
    %cst_42 = arith.constant -1.000000e+01 : f32
    %133 = vector.broadcast %cst_42 : f32 to vector<4x1xf32>
    %134 = arith.mulf %133, %132 : vector<4x1xf32>
    %135 = math.exp %134 : vector<4x1xf32>
    %cst_43 = arith.constant dense<0.000000e+00> : vector<1xf32>
    %136 = vector.multi_reduction <add>, %135, %cst_43 [0] : vector<4x1xf32> to vector<1xf32>
    %137 = vector.shape_cast %136 : vector<1xf32> to vector<1x1xf32>
    %c2_i32_44 = arith.constant 2 : i32
    %138 = vector.broadcast %c2_i32_44 : i32 to vector<4x4xi32>
    %139 = arith.cmpi eq, %11, %138 : vector<4x4xi32>
    %c3_i32_45 = arith.constant 3 : i32
    %140 = vector.broadcast %c3_i32_45 : i32 to vector<4x4xi32>
    %141 = arith.cmpi eq, %12, %140 : vector<4x4xi32>
    %142 = arith.andi %139, %141 : vector<4x4xi1>
    %c3_i32_46 = arith.constant 3 : i32
    %143 = vector.broadcast %c3_i32_46 : i32 to vector<4x4xi32>
    %144 = arith.cmpi eq, %11, %143 : vector<4x4xi32>
    %c2_i32_47 = arith.constant 2 : i32
    %145 = vector.broadcast %c2_i32_47 : i32 to vector<4x4xi32>
    %146 = arith.cmpi eq, %12, %145 : vector<4x4xi32>
    %147 = arith.andi %144, %146 : vector<4x4xi1>
    %148 = arith.ori %142, %147 : vector<4x4xi1>
    %149 = vector.shape_cast %137 : vector<1x1xf32> to vector<1x1xf32>
    %150 = vector.broadcast %149 : vector<1x1xf32> to vector<4x4xf32>
    %151 = arith.select %148, %150, %128 : vector<4x4xi1>, vector<4x4xf32>
    %c0_48 = arith.constant 0 : index
    %c0_49 = arith.constant 0 : index
    %152 = vector.load %arg3[%c0_48, %c0_49] : memref<4x4xf32, #tpu.memory_space<vmem>>, vector<4x4xf32>
    %153 = arith.addf %152, %151 : vector<4x4xf32>
    %c0_50 = arith.constant 0 : index
    %c0_51 = arith.constant 0 : index
    %154 = vector.load %arg3[%c0_50, %c0_51] : memref<4x4xf32, #tpu.memory_space<vmem>>, vector<4x4xf32>
    tpu.vector_store %arg3[%c0_50, %c0_51], %153 {strides = array<i32>} : memref<4x4xf32, #tpu.memory_space<vmem>>, vector<4x4xf32>,
    %c0_i32_52 = arith.constant 0 : i32
    %155 = arith.cmpi eq, %arg0, %c0_i32_52 : i32
    %156 = arith.extui %155 : i1 to i32
    %c0_i32_53 = arith.constant 0 : i32
    %157 = arith.cmpi ne, %156, %c0_i32_53 : i32
    scf.if %157 {
      %c0_54 = arith.constant 0 : index
      %c0_55 = arith.constant 0 : index
      %158 = vector.load %arg3[%c0_54, %c0_55] : memref<4x4xf32, #tpu.memory_space<vmem>>, vector<4x4xf32>
      %cst_56 = arith.constant 2.500000e-01 : f32
      %159 = vector.broadcast %cst_56 : f32 to vector<4x4xf32>
      %160 = arith.mulf %158, %159 : vector<4x4xf32>
      %c0_57 = arith.constant 0 : index
      %c0_58 = arith.constant 0 : index
      %161 = vector.load %arg2[%c0_57, %c0_58] : memref<4x4xf32, #tpu.memory_space<vmem>>, vector<4x4xf32>
      tpu.vector_store %arg2[%c0_57, %c0_58], %160 {strides = array<i32>} : memref<4x4xf32, #tpu.memory_space<vmem>>, vector<4x4xf32>,
    } else {
    }
    return
  }
  func.func @transform_0(%arg0: i32) -> (i32, i32, i32) {
    %c0_i32 = arith.constant 0 : i32
    %c0_i32_0 = arith.constant 0 : i32
    %c0_i32_1 = arith.constant 0 : i32
    return %c0_i32, %arg0, %c0_i32_0 : i32, i32, i32
  }
  func.func @transform_1(%arg0: i32) -> (i32, i32) {
    %c0_i32 = arith.constant 0 : i32
    %c0_i32_0 = arith.constant 0 : i32
    %c0_i32_1 = arith.constant 0 : i32
    return %c0_i32, %c0_i32_0 : i32, i32
  }
}

</mosaic_0001>

<llo_original>
// kernel: tpu_custom_call.1
$region0: #{tpu_custom_call.1}
  #allocation0 [shape = 'u32[]', space=smem, size = 0x4, offset = 0x4, fixed_abs, tag = 'smem constant byte address 0x4 - core index']
  #allocation1 [shape = 'u32[72,128]{1,0:T(1,128)}', space=vmem, size = 0x9000, scoped, tag = 'internal scratch']
  #allocation2 [shape = 'f32[4,4]{1,0:T(4,128)}', space=vmem, size = 0x800, scoped, tag = 'scratch operand']
  %s0 = inlined_call_operand.hbm [shape: f32[4,4,256], index: 0, kind: input, shape index: {}]
  %s1 = inlined_call_operand.hbm [shape: f32[4,4], index: 1, kind: output, shape index: {}]
  %s2 = sld [smem:[#allocation0]]
  $region26: #{tpu_custom_call.1} parent=0
    _
  %s4 = ssub.s32 1, %s2
  %s5 = scalar_select 0, %s4, %s2
  $region1: #{tpu_custom_call.1} parent=0
    #allocation3 [shape = 'u8[16384]{0}', space=vmem, size = 0x4000, scoped, tag = 'input window, operand 0, single buffered']
    #allocation4 [shape = 's32[1]{0}', space=sflag, size = 0x4, scoped, tag = 'scoped memory for tpu_custom_call.1']
    #allocation5 [shape = 's32[1]{0}', space=sflag, size = 0x4, scoped, tag = 'scoped memory for tpu_custom_call.1']
    #allocation6 [shape = 'u8[2048]{0}', space=vmem, size = 0x800, scoped, tag = 'output window, operand 0, single buffered']
    %6 = vsyncpa [#allocation4], 0
    %7 = vsyncpa [#allocation5], 0
    // Predicated region
    $region2: #{tpu_custom_call.1} parent=1 // pred_check
      _
    $region3: #{tpu_custom_call.1} parent=1 // pred_check_branch
      %9 = sbr.rel (0) target = $region5
    $region4: #{tpu_custom_call.1} parent=1 // pred_region
      %11 = vsyncadd [#allocation4], 0
      %s12 = sshll.u32 %s0, 4
      %s13 = int_to_ptr.hbm [resolvable:$true] %s12
      %s14 = sshll.u32 [#allocation3], 4
      %s15 = int_to_ptr.vmem [resolvable:$true] %s14
      %20 = dma.hbm_to_vmem [thread:$0]  %s13, 512, %s15, [#allocation4], 128, 128, 8
    $region5: #{tpu_custom_call.1} parent=1 // pred_fallthru
      _
    // Predicated region
    $region6: #{tpu_custom_call.1} parent=1 // pred_check
      _
    $region7: #{tpu_custom_call.1} parent=1 // pred_check_branch
      %22 = sbr.rel (0) target = $region9
    $region8: #{tpu_custom_call.1} parent=1 // pred_region
      %24 = dma.done [#allocation4], 512
    $region9: #{tpu_custom_call.1} parent=1 // pred_fallthru
      _
    %p25 = scmp.eq.s32.totalorder 0, 0
    // Predicated region
    $region10: #{tpu_custom_call.1} parent=1 // pred_check
      %p26 = pneg %p25
    $region11: #{tpu_custom_call.1} parent=1 // pred_check_branch
      %28 = sbr.rel (%p26) target = $region13
    $region12: #{tpu_custom_call.1} parent=1 // pred_region
      %vm29 = vcmask 27648
      %30 = vst.msk [vmem:[#allocation2] sm:$0xf] %vm29, 0.0
    $region13: #{tpu_custom_call.1} parent=1 // pred_fallthru
      _
    %v31 = vld [vmem:[#allocation3] sm:$0xff]
    %s32 = scalar_lea.vmem [#allocation3], 8
    %v33 = vld [vmem:[%s32] sm:$0xff]
    %s34 = scalar_lea.vmem [#allocation3], 16
    %v35 = vld [vmem:[%s34] sm:$0xff]
    %s36 = scalar_lea.vmem [#allocation3], 24
    %v37 = vld [vmem:[%s36] sm:$0xff]
    %v38 = vlaneseq
    %v39 = vshrl.u32 %v38, 7
    %v40 = vlaneseq
    %v41 = vand.u32 %v40, 127
    %v42 = vsub.f32 %v31, %v33
    %v43 = vmul.f32 %v42, %v42
    %45 = vst [vmem:[#allocation1] ss:$2 sm:$0xff] %v43
    %v46 = vld.sshfl [vmem:[#allocation1] sm:$0xff pattern:$0x75316420]
    %v47 = vld.sshfl [vmem:[#allocation1 + $0x8] sm:$0xff pattern:$0x75316420]
    %vm50 = vcmask 1043456
    %v51 = vsel %vm50, %v46, 0.0
    %v52 = vsel %vm50, %v47, 0.0
    %v53 = vadd.f32 %v51, %v52
    %54 = vadd.xlane.f32.xlu0 %v53
    %v55 = vpop.xlane.xlu0 %54
    %v56 = vmul.f32 %v55, -10.0
    %v57 = vmul.f32 %v56, 1.442695
    %v58 = vpow.pop %v57
    %v59 = vsel %vm50, %v58, 0.0
    %v60 = vrot.slane %v59, 4
    %v61 = vadd.f32 %v59, %v60
    %v62 = vrot.slane %v61, 2
    %v63 = vadd.f32 %v61, %v62
    %v64 = vrot.slane %v63, 1
    %v65 = vadd.f32 %v63, %v64
    %vm66 = vcmp.eq.s32.totalorder %v39, 0
    %vm67 = vcmp.eq.s32.totalorder %v41, 1
    %vm68 = vmand %vm66, %vm67
    %vm69 = vcmp.eq.s32.totalorder %v39, 1
    %vm70 = vcmp.eq.s32.totalorder %v41, 0
    %vm71 = vmand %vm69, %vm70
    %vm72 = vmor %vm68, %vm71
    %v73 = vsel %vm72, %v65, 0.0
    %v74 = vsub.f32 %v31, %v35
    %v75 = vmul.f32 %v74, %v74
    %77 = vst [vmem:[#allocation1] ss:$2 sm:$0xff] %v75
    %v78 = vld.sshfl [vmem:[#allocation1] sm:$0xff pattern:$0x75316420]
    %v79 = vld.sshfl [vmem:[#allocation1 + $0x8] sm:$0xff pattern:$0x75316420]
    %v82 = vsel %vm50, %v78, 0.0
    %v83 = vsel %vm50, %v79, 0.0
    %v84 = vadd.f32 %v82, %v83
    %85 = vadd.xlane.f32.xlu0 %v84
    %v86 = vpop.xlane.xlu0 %85
    %v87 = vmul.f32 %v86, -10.0
    %v88 = vmul.f32 %v87, 1.442695
    %v89 = vpow.pop %v88
    %v90 = vsel %vm50, %v89, 0.0
    %v91 = vrot.slane %v90, 4
    %v92 = vadd.f32 %v90, %v91
    %v93 = vrot.slane %v92, 2
    %v94 = vadd.f32 %v92, %v93
    %v95 = vrot.slane %v94, 1
    %v96 = vadd.f32 %v94, %v95
    %vm97 = vcmp.eq.s32.totalorder %v41, 2
    %vm98 = vmand %vm66, %vm97
    %vm99 = vcmp.eq.s32.totalorder %v39, 2
    %vm100 = vmand %vm99, %vm70
    %vm101 = vmor %vm98, %vm100
    %v102 = vsel %vm101, %v96, %v73
    %v103 = vsub.f32 %v31, %v37
    %v104 = vmul.f32 %v103, %v103
    %106 = vst [vmem:[#allocation1] ss:$2 sm:$0xff] %v104
    %v107 = vld.sshfl [vmem:[#allocation1] sm:$0xff pattern:$0x75316420]
    %v108 = vld.sshfl [vmem:[#allocation1 + $0x8] sm:$0xff pattern:$0x75316420]
    %v111 = vsel %vm50, %v107, 0.0
    %v112 = vsel %vm50, %v108, 0.0
    %v113 = vadd.f32 %v111, %v112
    %114 = vadd.xlane.f32.xlu0 %v113
    %v115 = vpop.xlane.xlu0 %114
    %v116 = vmul.f32 %v115, -10.0
    %v117 = vmul.f32 %v116, 1.442695
    %v118 = vpow.pop %v117
    %v119 = vsel %vm50, %v118, 0.0
    %v120 = vrot.slane %v119, 4
    %v121 = vadd.f32 %v119, %v120
    %v122 = vrot.slane %v121, 2
    %v123 = vadd.f32 %v121, %v122
    %v124 = vrot.slane %v123, 1
    %v125 = vadd.f32 %v123, %v124
    %vm126 = vcmp.eq.s32.totalorder %v41, 3
    %vm127 = vmand %vm66, %vm126
    %vm128 = vcmp.eq.s32.totalorder %v39, 3
    %vm129 = vmand %vm128, %vm70
    %vm130 = vmor %vm127, %vm129
    %v131 = vsel %vm130, %v125, %v102
    %v132 = vsub.f32 %v33, %v35
    %v133 = vmul.f32 %v132, %v132
    %135 = vst [vmem:[#allocation1] ss:$2 sm:$0xff] %v133
    %v136 = vld.sshfl [vmem:[#allocation1] sm:$0xff pattern:$0x75316420]
    %v137 = vld.sshfl [vmem:[#allocation1 + $0x8] sm:$0xff pattern:$0x75316420]
    %v140 = vsel %vm50, %v136, 0.0
    %v141 = vsel %vm50, %v137, 0.0
    %v142 = vadd.f32 %v140, %v141
    %143 = vadd.xlane.f32.xlu0 %v142
    %v144 = vpop.xlane.xlu0 %143
    %v145 = vmul.f32 %v144, -10.0
    %v146 = vmul.f32 %v145, 1.442695
    %v147 = vpow.pop %v146
    %v148 = vsel %vm50, %v147, 0.0
    %v149 = vrot.slane %v148, 4
    %v150 = vadd.f32 %v148, %v149
    %v151 = vrot.slane %v150, 2
    %v152 = vadd.f32 %v150, %v151
    %v153 = vrot.slane %v152, 1
    %v154 = vadd.f32 %v152, %v153
    %vm155 = vmand %vm69, %vm97
    %vm156 = vmand %vm99, %vm67
    %vm157 = vmor %vm155, %vm156
    %v158 = vsel %vm157, %v154, %v131
    %v159 = vsub.f32 %v33, %v37
    %v160 = vmul.f32 %v159, %v159
    %162 = vst [vmem:[#allocation1] ss:$2 sm:$0xff] %v160
    %v163 = vld.sshfl [vmem:[#allocation1] sm:$0xff pattern:$0x75316420]
    %v164 = vld.sshfl [vmem:[#allocation1 + $0x8] sm:$0xff pattern:$0x75316420]
    %v167 = vsel %vm50, %v163, 0.0
    %v168 = vsel %vm50, %v164, 0.0
    %v169 = vadd.f32 %v167, %v168
    %170 = vadd.xlane.f32.xlu0 %v169
    %v171 = vpop.xlane.xlu0 %170
    %v172 = vmul.f32 %v171, -10.0
    %v173 = vmul.f32 %v172, 1.442695
    %v174 = vpow.pop %v173
    %v175 = vsel %vm50, %v174, 0.0
    %v176 = vrot.slane %v175, 4
    %v177 = vadd.f32 %v175, %v176
    %v178 = vrot.slane %v177, 2
    %v179 = vadd.f32 %v177, %v178
    %v180 = vrot.slane %v179, 1
    %v181 = vadd.f32 %v179, %v180
    %vm182 = vmand %vm69, %vm126
    %vm183 = vmand %vm128, %vm67
    %vm184 = vmor %vm182, %vm183
    %v185 = vsel %vm184, %v181, %v158
    %v186 = vsub.f32 %v35, %v37
    %v187 = vmul.f32 %v186, %v186
    %189 = vst [vmem:[#allocation1] ss:$2 sm:$0xff] %v187
    %v190 = vld.sshfl [vmem:[#allocation1] sm:$0xff pattern:$0x75316420]
    %v191 = vld.sshfl [vmem:[#allocation1 + $0x8] sm:$0xff pattern:$0x75316420]
    %v194 = vsel %vm50, %v190, 0.0
    %v195 = vsel %vm50, %v191, 0.0
    %v196 = vadd.f32 %v194, %v195
    %197 = vadd.xlane.f32.xlu0 %v196
    %v198 = vpop.xlane.xlu0 %197
    %v199 = vmul.f32 %v198, -10.0
    %v200 = vmul.f32 %v199, 1.442695
    %v201 = vpow.pop %v200
    %v202 = vsel %vm50, %v201, 0.0
    %v203 = vrot.slane %v202, 4
    %v204 = vadd.f32 %v202, %v203
    %v205 = vrot.slane %v204, 2
    %v206 = vadd.f32 %v204, %v205
    %v207 = vrot.slane %v206, 1
    %v208 = vadd.f32 %v206, %v207
    %vm209 = vmand %vm99, %vm126
    %vm210 = vmand %vm128, %vm97
    %vm211 = vmor %vm209, %vm210
    %v212 = vsel %vm211, %v208, %v185
    %v213 = vld [vmem:[#allocation2] sm:$0xf]
    %v214 = vadd.f32 %v213, %v212
    %vm215 = vcmask 27648
    %216 = vst.msk [vmem:[#allocation2] sm:$0xf] %vm215, %v214
    // Predicated region
    $region14: #{tpu_custom_call.1} parent=1 // pred_check
      %p217 = pneg %p25
    $region15: #{tpu_custom_call.1} parent=1 // pred_check_branch
      %219 = sbr.rel (%p217) target = $region17
    $region16: #{tpu_custom_call.1} parent=1 // pred_region
      %v220 = vld [vmem:[#allocation2] sm:$0xf]
      %v221 = vmul.f32 %v220, 0.25
      %222 = vst.msk [vmem:[#allocation6] sm:$0xf] %vm215, %v221
    $region17: #{tpu_custom_call.1} parent=1 // pred_fallthru
      _
    // Predicated region
    $region18: #{tpu_custom_call.1} parent=1 // pred_check
      _
    $region19: #{tpu_custom_call.1} parent=1 // pred_check_branch
      %224 = sbr.rel (0) target = $region21
    $region20: #{tpu_custom_call.1} parent=1 // pred_region
      %226 = vsyncadd [#allocation5], 0
      %s228 = sshll.u32 [#allocation6], 4
      %s229 = int_to_ptr.vmem [resolvable:$true] %s228
      %s230 = sshll.u32 %s1, 4
      %s231 = int_to_ptr.hbm [resolvable:$true] %s230
      %233 = dma.vmem_to_hbm [thread:$0]  %s229, 64, %s231, [#allocation5]
    $region21: #{tpu_custom_call.1} parent=1 // pred_fallthru
      _
    // Predicated region
    $region22: #{tpu_custom_call.1} parent=1 // pred_check
      _
    $region23: #{tpu_custom_call.1} parent=1 // pred_check_branch
      %235 = sbr.rel (0) target = $region25
    $region24: #{tpu_custom_call.1} parent=1 // pred_region
      %237 = dma.done [#allocation5], 64
    $region25: #{tpu_custom_call.1} parent=1 // pred_fallthru
      _
    %238 = vsyncpa [#allocation4], 1
    %239 = vsyncpa [#allocation5], 1

</llo_original>
